<compile_context>
chip_gen: v6e
topology: v6e:2x2x1
jax: 0.10.0
libtpu: 0.0.40
codegen_flags: <defaults>
</compile_context>

<pallas_src>
import functools

import jax
import jax.numpy as jnp
from jax import lax
from jax.experimental import pallas as pl
from jax.experimental.pallas import tpu as pltpu

_LANES = 128
_SUBLANES = 8
_MAX_BLOCK_BYTES = 4 << 20  # 4 MiB per input per grid step (tm=8192 rows f32)


def _num_tensorcores() -> int:
    """Best-effort TensorCore-per-chip count; falls back to 1 (single TC)."""
    try:
        info = pltpu.get_tpu_info()
    except Exception:
        return 1
    for attr in ("num_cores", "core_count", "num_tensorcores",
                 "tensorcore_count", "cores_per_chip"):
        v = getattr(info, attr, None)
        if isinstance(v, int) and 1 <= v <= 8:
            return v
    return 1


def _l1_partial_kernel(s_ref, t_ref, out_ref, *, tm, steps_per_core, nrows):
    """Per-core partial L1 sum of |s - t| accumulated into an (8,128) output.

    s_ref/t_ref : VMEM (tm, 128) blocks (native dtype, cast to f32 in-kernel)
    out_ref     : VMEM (8, 128) f32 per-core accumulator (output-resident
                  across the inner reduction axis; summed in the wrapper)
    """
    c = pl.program_id(0)          # core / parallel axis
    k = pl.program_id(1)          # reduction axis (innermost)

    @pl.when(k == 0)
    def _():
        out_ref[...] = jnp.zeros_like(out_ref)

    b = c * steps_per_core + k    # linear (unclamped) block id
    diff = jnp.abs(s_ref[...].astype(jnp.float32) -
                   t_ref[...].astype(jnp.float32))

    full = (b + 1) * tm <= nrows  # block entirely within valid rows?

    @pl.when(full)                # hot path: pure VALU vreg adds
    def _():
        out_ref[...] += jnp.sum(diff.reshape(tm // _SUBLANES,
                                             _SUBLANES, _LANES), axis=0)

    @pl.when(jnp.logical_not(full))  # ragged tail / duplicate overhang block
    def _():
        row = b * tm + lax.broadcasted_iota(jnp.int32, diff.shape, 0)
        # NOTE: keep this a where-select (not multiply-by-mask): the region
        # beyond `nrows` may hold garbage/NaN from a partial DMA.
        masked = jnp.where(row < nrows, diff, 0.0)
        out_ref[...] += jnp.sum(masked.reshape(tm // _SUBLANES,
                                               _SUBLANES, _LANES), axis=0)


def kd_layer_loss(ce_loss, alpha, student_layer, teacher_layer):
    s = jnp.reshape(student_layer, (-1,))
    t = jnp.reshape(teacher_layer, (-1,))
    n = s.shape[0]

    # Pad flat data to a multiple of 8*128 so the lane-dense (M,128) view has
    # M % 8 == 0 (free for the common case; padded zeros contribute 0 to the
    # L1 sum and the mean divides by the true n).
    pad = (-n) % (_SUBLANES * _LANES)
    if pad:
        s = jnp.pad(s, (0, pad))
        t = jnp.pad(t, (0, pad))

    m = s.shape[0] // _LANES      # multiple of 8
    s2 = s.reshape(m, _LANES)
    t2 = t.reshape(m, _LANES)

    itemsize = s2.dtype.itemsize
    max_tm = max(_SUBLANES,
                 (_MAX_BLOCK_BYTES // (_LANES * itemsize))
                 // _SUBLANES * _SUBLANES)
    tm = min(max_tm, m)           # multiple of 8 either way
    total_blocks = pl.cdiv(m, tm)

    # Shard the row stream across TensorCores only where there are >1 TCs
    # (v7x); on single-TC v5e/v6e keep a single stream (no duplicated
    # overhang block, no wasted grid step).
    cores = _num_tensorcores()
    n_par = cores if (cores >= 2 and total_blocks >= 2) else 1
    steps_per_core = pl.cdiv(total_blocks, n_par)

    def row_map(c, k):
        b = c * steps_per_core + k
        # Clamp so an overhanging (fully-masked) block never DMAs past the
        # array; its contribution is zeroed in-kernel via the row mask.
        return (jnp.minimum(b, total_blocks - 1), 0)

    kernel = functools.partial(_l1_partial_kernel, tm=tm,
                               steps_per_core=steps_per_core, nrows=m)

    # Explicit scoped-VMEM budget: 2 inputs x 2 pipeline buffers x block
    # (+ tiny output) with headroom.  ~24 MiB at the max block size, which
    # fits v5e/v6e (128 MiB) and v7x (64 MiB) physical VMEM comfortably.
    block_bytes = tm * _LANES * itemsize
    vmem_need = 2 * 2 * block_bytes + 4 * n_par * _SUBLANES * _LANES * 4
    vmem_limit = int(min(max(vmem_need + (8 << 20), 16 << 20), 96 << 20))

    bytes_accessed = 2 * int(s2.size) * itemsize + n_par * _SUBLANES * _LANES * 4

    partials = pl.pallas_call(
        kernel,
        out_shape=jax.ShapeDtypeStruct((n_par, _SUBLANES, _LANES), jnp.float32),
        grid_spec=pltpu.PrefetchScalarGridSpec(
            num_scalar_prefetch=0,
            grid=(n_par, steps_per_core),
            in_specs=[
                pl.BlockSpec((tm, _LANES), row_map),   # student slab
                pl.BlockSpec((tm, _LANES), row_map),   # teacher slab
            ],
            # (8,128) lane/sublane-dense per-core output; leading dim squeezed.
            out_specs=pl.BlockSpec((None, _SUBLANES, _LANES),
                                   lambda c, k: (c, 0, 0)),
        ),
        compiler_params=pltpu.CompilerParams(
            dimension_semantics=("parallel", "arbitrary"),
            vmem_limit_bytes=vmem_limit,
        ),
        cost_estimate=pl.CostEstimate(
            flops=3 * n, transcendentals=0, bytes_accessed=bytes_accessed),
    )(s2, t2)

    # Tiny final reduction + alpha blend in plain XLA.
    l1 = jnp.sum(partials) / jnp.float32(n)
    ce = jnp.asarray(ce_loss, jnp.float32).reshape(())
    a = jnp.asarray(alpha, jnp.float32)
    return a * ce + (1.0 - a) * l1


if __name__ == "__main__":
    key = jax.random.PRNGKey(0)
    k1, k2, k3, k4, k5 = jax.random.split(key, 5)

    # 1) Small conv-feature-map shapes (NCHW) consistent with the module.
    student = jax.random.normal(k1, (2, 4, 16, 16), dtype=jnp.float32)
    teacher = jax.random.normal(k2, (2, 4, 16, 16), dtype=jnp.float32)
    ce_loss = jax.random.uniform(k3, (), dtype=jnp.float32)
    alpha = 0.7

    out = kd_layer_loss(ce_loss, alpha, student, teacher)
    out = jax.block_until_ready(out)
    ref = alpha * ce_loss + (1.0 - alpha) * jnp.mean(jnp.abs(student - teacher))
    assert jnp.allclose(out, ref, atol=1e-5, rtol=1e-5), (out, ref)

    # 2) Larger map exercising multi-block streaming and the masked ragged
    #    tail block (16640 rows -> 2 full 8192-row blocks + a 256-row tail).
    student2 = jax.random.normal(k4, (8, 64, 65, 64), dtype=jnp.float32)
    teacher2 = jax.random.normal(k5, (8, 64, 65, 64), dtype=jnp.float32)
    out2 = kd_layer_loss(ce_loss, alpha, student2, teacher2)
    out2 = jax.block_until_ready(out2)
    ref2 = alpha * ce_loss + (1.0 - alpha) * jnp.mean(jnp.abs(student2 - teacher2))
    assert jnp.allclose(out2, ref2, atol=1e-5, rtol=1e-5), (out2, ref2)

    print("KERNEL_OK")
</pallas_src>

<mosaic_0001>
module attributes {stable_mosaic.version = 11 : i64} {
  func.func @_l1_partial_kernel(%arg0: i32, %arg1: i32, %arg2: memref<16x128xf32, #tpu.memory_space<vmem>>, %arg3: memref<16x128xf32, #tpu.memory_space<vmem>>, %arg4: memref<1x8x128xf32, #tpu.memory_space<vmem>>) attributes {dimension_semantics = [#tpu.dimension_semantics<parallel>, #tpu.dimension_semantics<arbitrary>], iteration_bounds = array<i64: 1, 1>, scalar_prefetch = 0 : i64, scratch_operands = 0 : i64, tpu.core_type = #tpu.core_type<tc>, window_params = [{transform_indices = @transform_0, window_bounds = array<i64: 16, 128>}, {transform_indices = @transform_1, window_bounds = array<i64: 16, 128>}, {transform_indices = @transform_2, window_bounds = array<i64: 1, 8, 128>}]} {
    %c0_i32 = arith.constant 0 : i32
    %0 = arith.cmpi eq, %arg1, %c0_i32 : i32
    %1 = arith.extui %0 : i1 to i32
    %c0_i32_0 = arith.constant 0 : i32
    %2 = arith.cmpi ne, %1, %c0_i32_0 : i32
    scf.if %2 {
      %cst = arith.constant 0.000000e+00 : f32
      %17 = vector.broadcast %cst : f32 to vector<8x128xf32>
      %c0_8 = arith.constant 0 : index
      %c0_9 = arith.constant 0 : index
      %c0_10 = arith.constant 0 : index
      %18 = vector.load %arg4[%c0_8, %c0_9, %c0_10] : memref<1x8x128xf32, #tpu.memory_space<vmem>>, vector<1x8x128xf32>
      %19 = vector.shape_cast %18 : vector<1x8x128xf32> to vector<8x128xf32>
      %20 = vector.shape_cast %17 : vector<8x128xf32> to vector<1x8x128xf32>
      tpu.vector_store %arg4[%c0_8, %c0_9, %c0_10], %20 {strides = array<i32>} : memref<1x8x128xf32, #tpu.memory_space<vmem>>, vector<1x8x128xf32>,
    } else {
    }
    %c1_i32 = arith.constant 1 : i32
    %3 = arith.muli %arg0, %c1_i32 : i32
    %4 = arith.addi %3, %arg1 : i32
    %c0 = arith.constant 0 : index
    %c0_1 = arith.constant 0 : index
    %5 = vector.load %arg2[%c0, %c0_1] : memref<16x128xf32, #tpu.memory_space<vmem>>, vector<16x128xf32>
    %c0_2 = arith.constant 0 : index
    %c0_3 = arith.constant 0 : index
    %6 = vector.load %arg3[%c0_2, %c0_3] : memref<16x128xf32, #tpu.memory_space<vmem>>, vector<16x128xf32>
    %7 = arith.subf %5, %6 : vector<16x128xf32>
    %8 = math.absf %7 : vector<16x128xf32>
    %c1_i32_4 = arith.constant 1 : i32
    %9 = arith.addi %4, %c1_i32_4 : i32
    %c16_i32 = arith.constant 16 : i32
    %10 = arith.muli %9, %c16_i32 : i32
    %c16_i32_5 = arith.constant 16 : i32
    %11 = arith.cmpi sle, %10, %c16_i32_5 : i32
    %12 = arith.extui %11 : i1 to i32
    %c0_i32_6 = arith.constant 0 : i32
    %13 = arith.cmpi ne, %12, %c0_i32_6 : i32
    scf.if %13 {
      %c0_8 = arith.constant 0 : index
      %c0_9 = arith.constant 0 : index
      %c0_10 = arith.constant 0 : index
      %17 = vector.load %arg4[%c0_8, %c0_9, %c0_10] : memref<1x8x128xf32, #tpu.memory_space<vmem>>, vector<1x8x128xf32>
      %18 = vector.shape_cast %17 : vector<1x8x128xf32> to vector<8x128xf32>
      %19 = vector.shape_cast %8 : vector<16x128xf32> to vector<2x8x128xf32>
      %cst = arith.constant dense<0.000000e+00> : vector<8x128xf32>
      %20 = vector.multi_reduction <add>, %19, %cst [0] : vector<2x8x128xf32> to vector<8x128xf32>
      %21 = arith.addf %18, %20 : vector<8x128xf32>
      %c0_11 = arith.constant 0 : index
      %c0_12 = arith.constant 0 : index
      %c0_13 = arith.constant 0 : index
      %22 = vector.load %arg4[%c0_11, %c0_12, %c0_13] : memref<1x8x128xf32, #tpu.memory_space<vmem>>, vector<1x8x128xf32>
      %23 = vector.shape_cast %22 : vector<1x8x128xf32> to vector<8x128xf32>
      %24 = vector.shape_cast %21 : vector<8x128xf32> to vector<1x8x128xf32>
      tpu.vector_store %arg4[%c0_11, %c0_12, %c0_13], %24 {strides = array<i32>} : memref<1x8x128xf32, #tpu.memory_space<vmem>>, vector<1x8x128xf32>,
    } else {
    }
    %true = arith.constant true
    %14 = arith.xori %11, %true : i1
    %15 = arith.extui %14 : i1 to i32
    %c0_i32_7 = arith.constant 0 : i32
    %16 = arith.cmpi ne, %15, %c0_i32_7 : i32
    scf.if %16 {
      %c16_i32_8 = arith.constant 16 : i32
      %17 = arith.muli %4, %c16_i32_8 : i32
      %18 = tpu.iota {dimensions = array<i32: 0>} : vector<16x128xi32>
      %19 = vector.broadcast %17 : i32 to vector<16x128xi32>
      %20 = arith.addi %19, %18 : vector<16x128xi32>
      %c16_i32_9 = arith.constant 16 : i32
      %21 = vector.broadcast %c16_i32_9 : i32 to vector<16x128xi32>
      %22 = arith.cmpi slt, %20, %21 : vector<16x128xi32>
      %cst = arith.constant 0.000000e+00 : f32
      %23 = vector.broadcast %cst : f32 to vector<16x128xf32>
      %24 = arith.select %22, %8, %23 : vector<16x128xi1>, vector<16x128xf32>
      %c0_10 = arith.constant 0 : index
      %c0_11 = arith.constant 0 : index
      %c0_12 = arith.constant 0 : index
      %25 = vector.load %arg4[%c0_10, %c0_11, %c0_12] : memref<1x8x128xf32, #tpu.memory_space<vmem>>, vector<1x8x128xf32>
      %26 = vector.shape_cast %25 : vector<1x8x128xf32> to vector<8x128xf32>
      %27 = vector.shape_cast %24 : vector<16x128xf32> to vector<2x8x128xf32>
      %cst_13 = arith.constant dense<0.000000e+00> : vector<8x128xf32>
      %28 = vector.multi_reduction <add>, %27, %cst_13 [0] : vector<2x8x128xf32> to vector<8x128xf32>
      %29 = arith.addf %26, %28 : vector<8x128xf32>
      %c0_14 = arith.constant 0 : index
      %c0_15 = arith.constant 0 : index
      %c0_16 = arith.constant 0 : index
      %30 = vector.load %arg4[%c0_14, %c0_15, %c0_16] : memref<1x8x128xf32, #tpu.memory_space<vmem>>, vector<1x8x128xf32>
      %31 = vector.shape_cast %30 : vector<1x8x128xf32> to vector<8x128xf32>
      %32 = vector.shape_cast %29 : vector<8x128xf32> to vector<1x8x128xf32>
      tpu.vector_store %arg4[%c0_14, %c0_15, %c0_16], %32 {strides = array<i32>} : memref<1x8x128xf32, #tpu.memory_space<vmem>>, vector<1x8x128xf32>,
    } else {
    }
    return
  }
  func.func @transform_0(%arg0: i32, %arg1: i32) -> (i32, i32) {
    %c1_i32 = arith.constant 1 : i32
    %0 = arith.muli %arg0, %c1_i32 : i32
    %1 = arith.addi %0, %arg1 : i32
    %c0_i32 = arith.constant 0 : i32
    %2 = arith.minsi %1, %c0_i32 : i32
    %c0_i32_0 = arith.constant 0 : i32
    %c0_i32_1 = arith.constant 0 : i32
    return %2, %c0_i32_0 : i32, i32
  }
  func.func @transform_1(%arg0: i32, %arg1: i32) -> (i32, i32) {
    %c1_i32 = arith.constant 1 : i32
    %0 = arith.muli %arg0, %c1_i32 : i32
    %1 = arith.addi %0, %arg1 : i32
    %c0_i32 = arith.constant 0 : i32
    %2 = arith.minsi %1, %c0_i32 : i32
    %c0_i32_0 = arith.constant 0 : i32
    %c0_i32_1 = arith.constant 0 : i32
    return %2, %c0_i32_0 : i32, i32
  }
  func.func @transform_2(%arg0: i32, %arg1: i32) -> (i32, i32, i32) {
    %c0_i32 = arith.constant 0 : i32
    %c0_i32_0 = arith.constant 0 : i32
    %c0_i32_1 = arith.constant 0 : i32
    return %arg0, %c0_i32, %c0_i32_0 : i32, i32, i32
  }
}

</mosaic_0001>

<llo_original>
// kernel: tpu_custom_call.1
$region0: #{tpu_custom_call.1}
  #allocation0 [shape = 'u32[]', space=smem, size = 0x4, offset = 0x4, fixed_abs, tag = 'smem constant byte address 0x4 - core index']
  #allocation1 [shape = 'u32[144,128]{1,0:T(1,128)}', space=vmem, size = 0x12000, scoped, tag = 'internal scratch']
  %s0 = inlined_call_operand.hbm [shape: f32[16,128], index: 0, kind: input, shape index: {}]
  %s1 = inlined_call_operand.hbm [shape: f32[16,128], index: 1, kind: input, shape index: {}]
  %s2 = inlined_call_operand.hbm [shape: f32[1,8,128], index: 2, kind: output, shape index: {}]
  %s3 = sld [smem:[#allocation0]]
  $region38: #{tpu_custom_call.1} parent=0
    _
  %s5 = ssub.s32 1, %s3
  %s6 = scalar_select 0, %s5, %s3
  $region1: #{tpu_custom_call.1} parent=0
    #allocation2 [shape = 'u8[8192]{0}', space=vmem, size = 0x2000, scoped, tag = 'input window, operand 0, single buffered']
    #allocation3 [shape = 's32[1]{0}', space=sflag, size = 0x4, scoped, tag = 'scoped memory for tpu_custom_call.1']
    #allocation4 [shape = 's32[1]{0}', space=sflag, size = 0x4, scoped, tag = 'scoped memory for tpu_custom_call.1']
    #allocation5 [shape = 'u8[8192]{0}', space=vmem, size = 0x2000, scoped, tag = 'input window, operand 1, single buffered']
    #allocation6 [shape = 's32[1]{0}', space=sflag, size = 0x4, scoped, tag = 'scoped memory for tpu_custom_call.1']
    #allocation7 [shape = 'u8[4096]{0}', space=vmem, size = 0x1000, scoped, tag = 'output window, operand 0, single buffered']
    %7 = vsyncpa [#allocation3], 0
    %8 = vsyncpa [#allocation6], 0
    %9 = vsyncpa [#allocation4], 0
    // Predicated region
    $region2: #{tpu_custom_call.1} parent=1 // pred_check
      _
    $region3: #{tpu_custom_call.1} parent=1 // pred_check_branch
      %11 = sbr.rel (0) target = $region5
    $region4: #{tpu_custom_call.1} parent=1 // pred_region
      %s12 = sadd.s32 0, 0
      %p13 = scmp.lt.s32.totalorder %s12, 0
      %s14 = scalar_select %p13, %s12, 0
      %s15 = smul.u32 2, %s14
      %s17 = ssub.s32 256, 256
      %18 = vsyncadd [#allocation3], %s17
      %s19 = smul.addr %s15, 128
      %s20 = scalar_lea.hbm %s0, %s19
      %s21 = sshll.u32 [#allocation2], 4
      %s22 = int_to_ptr.vmem [resolvable:$true] %s21
      %27 = dma.hbm_to_vmem [thread:$0]  %s20, 256, %s22, [#allocation3], 128, 128, 8
    $region5: #{tpu_custom_call.1} parent=1 // pred_fallthru
      _
    // Predicated region
    $region6: #{tpu_custom_call.1} parent=1 // pred_check
      _
    $region7: #{tpu_custom_call.1} parent=1 // pred_check_branch
      %29 = sbr.rel (0) target = $region9
    $region8: #{tpu_custom_call.1} parent=1 // pred_region
      %s30 = sadd.s32 0, 0
      %p31 = scmp.lt.s32.totalorder %s30, 0
      %s32 = scalar_select %p31, %s30, 0
      %s33 = smul.u32 2, %s32
      %s35 = ssub.s32 256, 256
      %36 = vsyncadd [#allocation6], %s35
      %s37 = smul.addr %s33, 128
      %s38 = scalar_lea.hbm %s1, %s37
      %s39 = sshll.u32 [#allocation5], 4
      %s40 = int_to_ptr.vmem [resolvable:$true] %s39
      %45 = dma.hbm_to_vmem [thread:$0]  %s38, 256, %s40, [#allocation6], 128, 128, 8
    $region9: #{tpu_custom_call.1} parent=1 // pred_fallthru
      _
    // Predicated region
    $region10: #{tpu_custom_call.1} parent=1 // pred_check
      _
    $region11: #{tpu_custom_call.1} parent=1 // pred_check_branch
      %47 = sbr.rel (0) target = $region13
    $region12: #{tpu_custom_call.1} parent=1 // pred_region
      %48 = dma.done [#allocation3], 256
    $region13: #{tpu_custom_call.1} parent=1 // pred_fallthru
      _
    // Predicated region
    $region14: #{tpu_custom_call.1} parent=1 // pred_check
      _
    $region15: #{tpu_custom_call.1} parent=1 // pred_check_branch
      %50 = sbr.rel (0) target = $region17
    $region16: #{tpu_custom_call.1} parent=1 // pred_region
      %51 = dma.done [#allocation6], 256
    $region17: #{tpu_custom_call.1} parent=1 // pred_fallthru
      _
    %s52 = sadd.s32 0, 0
    %p53 = scmp.lt.s32.totalorder %s52, 0
    %s54 = scalar_select %p53, %s52, 0
    %s55 = smul.u32 2, %s54
    %s56 = sadd.s32 0, 0
    %p57 = scmp.lt.s32.totalorder %s56, 0
    %s58 = scalar_select %p57, %s56, 0
    %s59 = smul.u32 2, %s58
    %p60 = scmp.eq.s32.totalorder 0, 0
    // Predicated region
    $region18: #{tpu_custom_call.1} parent=1 // pred_check
      %p61 = pneg %p60
    $region19: #{tpu_custom_call.1} parent=1 // pred_check_branch
      %63 = sbr.rel (%p61) target = $region21
    $region20: #{tpu_custom_call.1} parent=1 // pred_region
      %64 = vst [vmem:[#allocation7] sm:$0xff] 0.0
    $region21: #{tpu_custom_call.1} parent=1 // pred_fallthru
      _
    %s65 = sadd.s32 0, 0
    %v66 = vld [vmem:[#allocation2] sm:$0xff]
    %v67 = vld [vmem:[#allocation2 + $0x8] sm:$0xff]
    %v68 = vld [vmem:[#allocation5] sm:$0xff]
    %v69 = vld [vmem:[#allocation5 + $0x8] sm:$0xff]
    %v70 = vsub.f32 %v66, %v68
    %v71 = vsub.f32 %v67, %v69
    %v72 = vand.u32 2147483647, %v70
    %v73 = vand.u32 2147483647, %v71
    %s74 = sadd.s32 %s65, 1
    %s75 = smul.u32 %s74, 16
    %p76 = scmp.le.s32.totalorder %s75, 16
    // Predicated region
    $region22: #{tpu_custom_call.1} parent=1 // pred_check
      %p77 = pneg %p76
    $region23: #{tpu_custom_call.1} parent=1 // pred_check_branch
      %79 = sbr.rel (%p77) target = $region25
    $region24: #{tpu_custom_call.1} parent=1 // pred_region
      %v80 = vld [vmem:[#allocation7] sm:$0xff]
      %v81 = vadd.f32 %v72, %v73
      %v82 = vadd.f32 %v80, %v81
      %83 = vst [vmem:[#allocation7] sm:$0xff] %v82
    $region25: #{tpu_custom_call.1} parent=1 // pred_fallthru
      _
    %p84 = scmp.gt.s32.totalorder %s75, 16
    // Predicated region
    $region26: #{tpu_custom_call.1} parent=1 // pred_check
      %p85 = pneg %p84
    $region27: #{tpu_custom_call.1} parent=1 // pred_check_branch
      %87 = sbr.rel (%p85) target = $region29
    $region28: #{tpu_custom_call.1} parent=1 // pred_region
      %s88 = smul.u32 %s65, 16
      %v89 = vlaneseq
      %v90 = vshrl.u32 %v89, 7
      %v91 = vadd.s32 %v90, 8
      %v92 = vstv %s88
      %v93 = vadd.s32 %v92, %v90
      %v94 = vadd.s32 %v92, %v91
      %vm95 = vcmp.lt.s32.totalorder %v93, 16
      %vm96 = vcmp.lt.s32.totalorder %v94, 16
      %v97 = vsel %vm95, %v72, 0.0
      %v98 = vsel %vm96, %v73, 0.0
      %v99 = vld [vmem:[#allocation7] sm:$0xff]
      %v100 = vadd.f32 %v97, %v98
      %v101 = vadd.f32 %v99, %v100
      %102 = vst [vmem:[#allocation7] sm:$0xff] %v101
    $region29: #{tpu_custom_call.1} parent=1 // pred_fallthru
      _
    // Predicated region
    $region30: #{tpu_custom_call.1} parent=1 // pred_check
      _
    $region31: #{tpu_custom_call.1} parent=1 // pred_check_branch
      %104 = sbr.rel (0) target = $region33
    $region32: #{tpu_custom_call.1} parent=1 // pred_region
      %s106 = ssub.s32 128, 128
      %107 = vsyncadd [#allocation4], %s106
      %s109 = sshll.u32 [#allocation7], 4
      %s110 = int_to_ptr.vmem [resolvable:$true] %s109
      %112 = dma.vmem_to_hbm [thread:$0]  %s110, 128, %s2, [#allocation4]
    $region33: #{tpu_custom_call.1} parent=1 // pred_fallthru
      _
    // Predicated region
    $region34: #{tpu_custom_call.1} parent=1 // pred_check
      _
    $region35: #{tpu_custom_call.1} parent=1 // pred_check_branch
      %114 = sbr.rel (0) target = $region37
    $region36: #{tpu_custom_call.1} parent=1 // pred_region
      %115 = dma.done [#allocation4], 128
    $region37: #{tpu_custom_call.1} parent=1 // pred_fallthru
      _
    %116 = vsyncpa [#allocation3], 1
    %117 = vsyncpa [#allocation6], 1
    %118 = vsyncpa [#allocation4], 1

</llo_original>
